<compile_context>
chip_gen: v5e
topology: v5e:2x2
jax: 0.10.0
libtpu: 0.0.40
codegen_flags: <defaults>
</compile_context>

<pallas_src>
import functools

import jax
import jax.numpy as jnp
from jax.experimental import pallas as pl
from jax.experimental.pallas import tpu as pltpu

NEG_SLOPE = 0.01  # PyTorch F.leaky_relu default


def _leaky_relu(x):
    return jnp.where(x >= 0, x, NEG_SLOPE * x)


def _softplus(x):
    # numerically stable softplus, matches torch.nn.functional.softplus (beta=1)
    return jnp.maximum(x, 0.0) + jnp.log1p(jnp.exp(-jnp.abs(x)))


def _round_up(n, m):
    return ((n + m - 1) // m) * m


def actor_forward_kernel(
    x_ref,                       # [in_dim, tile_b]  f32 (cast to bf16 here)
    w_in_ref, b_in_ref,          # [hidden, in_dim] bf16, [hidden, 1] f32
    w_h0_ref, b_h0_ref,
    w_h1_ref, b_h1_ref,
    w_a_ref, b_a_ref,            # [6, hidden] bf16, [6, 1] f32
    w_b_ref, b_b_ref,
    a_out_ref, b_out_ref,        # [6, tile_b] f32 each (lane-dense stores)
    *, hidden_bf16: bool,
):
    # In-kernel cast: a few VPU ops hidden under the tile DMA; avoids a separate
    # XLA cast pass over x in HBM.
    xt = x_ref[...].astype(jnp.bfloat16)

    def dense(w_ref, b_ref, act):
        # [out, in] @ [in, tile_b] -> [out, tile_b], f32 accumulate, bias on lanes.
        return (
            jnp.dot(w_ref[...], act, preferred_element_type=jnp.float32)
            + b_ref[...]
        )

    def maybe_bf16(h):
        # bf16 operands feed the MXU at full rate on v6e/v7x; on v5e the casts
        # are pure VALU pack work -> disable via hidden_bf16=False if VALU-bound.
        return h.astype(jnp.bfloat16) if hidden_bf16 else h

    h = maybe_bf16(_leaky_relu(dense(w_in_ref, b_in_ref, xt)))
    h = maybe_bf16(_leaky_relu(dense(w_h0_ref, b_h0_ref, h)))
    h = maybe_bf16(_leaky_relu(dense(w_h1_ref, b_h1_ref, h)))

    a_out_ref[...] = _softplus(dense(w_a_ref, b_a_ref, h)) + 1.0
    b_out_ref[...] = _softplus(dense(w_b_ref, b_b_ref, h)) + 1.0


def actor_forward(x, params, *, tile_cap=2048, hidden_bf16=True):
    """x: [B, input_size] float32 -> (a, b) each [B, 6] float32."""
    B, in_dim = x.shape
    hidden = params["w_in"].shape[0]

    # Layout plumbing only: present x with batch on the lane axis.  Kept in f32;
    # the bf16 cast happens inside the kernel.
    xt = x.T  # [in_dim, B]

    # Batch tiling: equal-sized lane-dense chunks (multiple of 128 lanes), large
    # enough to amortize the ~0.35us per-grid-step overhead, and >= 2 chunks for
    # big batches so v7x megacore has both TensorCores busy on the "parallel"
    # axis.  The grid uses cdiv -> no wrapper-side padding; Pallas handles the
    # ragged last block (padding lanes are column-independent garbage, masked on
    # store).
    n_tiles = max(pl.cdiv(B, tile_cap), 2 if B >= 256 else 1)
    tile_b = _round_up(pl.cdiv(B, n_tiles), 128)
    grid = (pl.cdiv(B, tile_b),)

    def resident(shape):
        # Constant block index -> DMA'd once, stays resident in VMEM across the
        # batch grid.  At hidden=32 this is ~3 KiB total.
        # NOTE(v7x): if hidden is ever scaled to >=1024, these resident blocks
        # are double-buffered by default (~2x 2*hidden^2 bf16); either set
        # pipeline_mode=pl.Buffered(1) on them or raise vmem_limit_bytes with
        # headroom against v7x's 64 MiB physical VMEM.
        return pl.BlockSpec(shape, lambda i: (0, 0))

    kernel = functools.partial(actor_forward_kernel, hidden_bf16=hidden_bf16)

    a_t, b_t = pl.pallas_call(
        kernel,
        grid=grid,
        out_shape=(
            jax.ShapeDtypeStruct((6, B), jnp.float32),
            jax.ShapeDtypeStruct((6, B), jnp.float32),
        ),
        in_specs=[
            pl.BlockSpec((in_dim, tile_b), lambda i: (0, i)),   # batch-tiled x^T
            resident((hidden, in_dim)), resident((hidden, 1)),
            resident((hidden, hidden)), resident((hidden, 1)),
            resident((hidden, hidden)), resident((hidden, 1)),
            resident((6, hidden)), resident((6, 1)),
            resident((6, hidden)), resident((6, 1)),
        ],
        out_specs=(
            pl.BlockSpec((6, tile_b), lambda i: (0, i)),
            pl.BlockSpec((6, tile_b), lambda i: (0, i)),
        ),
        compiler_params=pltpu.CompilerParams(
            # batch axis is embarrassingly parallel -> megacore sharding on v7x
            dimension_semantics=("parallel",),
            # tiles are tiny (x tile <=128 KiB f32, activations <=256 KiB f32);
            # 32 MiB scoped VMEM is safe on v5e/v6e/v7x alike.
            vmem_limit_bytes=32 * 1024 * 1024,
        ),
    )(
        xt,
        params["w_in"], params["b_in"],
        params["w_h0"], params["b_h0"],
        params["w_h1"], params["b_h1"],
        params["w_a"], params["b_a"],
        params["w_b"], params["b_b"],
    )
    # Tiny [6, B] -> [B, 6] layout fix-ups for the caller-facing API.
    return a_t.T, b_t.T


def init_params(key, input_size, hidden_size):
    """Deterministic init mimicking nn.Linear (uniform +/- 1/sqrt(fan_in)).

    Weights stored as [out, in] in bf16 (MXU operands for the transposed,
    lane-dense dataflow); biases as [out, 1] in f32 (lane-broadcast).
    """
    def linear_t(k, fan_in, fan_out):
        kw, kb = jax.random.split(k)
        bound = 1.0 / jnp.sqrt(float(fan_in))
        w_t = jax.random.uniform(kw, (fan_out, fan_in), jnp.float32, -bound, bound)
        b = jax.random.uniform(kb, (fan_out, 1), jnp.float32, -bound, bound)
        return w_t.astype(jnp.bfloat16), b

    keys = jax.random.split(key, 6)
    w_in, b_in = linear_t(keys[0], input_size, hidden_size)
    w_h0, b_h0 = linear_t(keys[1], hidden_size, hidden_size)
    w_h1, b_h1 = linear_t(keys[2], hidden_size, hidden_size)
    w_h2, b_h2 = linear_t(keys[3], hidden_size, hidden_size)  # unused in forward (matches PyTorch)
    w_a, b_a = linear_t(keys[4], hidden_size, 6)
    w_b, b_b = linear_t(keys[5], hidden_size, 6)
    return {
        "w_in": w_in, "b_in": b_in,
        "w_h0": w_h0, "b_h0": b_h0,
        "w_h1": w_h1, "b_h1": b_h1,
        "w_h2": w_h2, "b_h2": b_h2,
        "w_a": w_a, "b_a": b_a,
        "w_b": w_b, "b_b": b_b,
    }


def actor_forward_ref(x, p):
    """Pure-JAX reference with the same bf16-operand / f32-accumulate precision."""
    def dense(act, w_t, b):
        y = jnp.dot(act.astype(jnp.bfloat16), w_t.T, preferred_element_type=jnp.float32)
        return y + b.T

    h = jax.nn.leaky_relu(dense(x, p["w_in"], p["b_in"]), NEG_SLOPE)
    h = jax.nn.leaky_relu(dense(h, p["w_h0"], p["b_h0"]), NEG_SLOPE)
    h = jax.nn.leaky_relu(dense(h, p["w_h1"], p["b_h1"]), NEG_SLOPE)
    a = jax.nn.softplus(dense(h, p["w_a"], p["b_a"])) + 1.0
    b = jax.nn.softplus(dense(h, p["w_b"], p["b_b"])) + 1.0
    return a, b


if __name__ == "__main__":
    key = jax.random.PRNGKey(0)
    k_param, k_x = jax.random.split(key)

    batch = 8
    input_size = 16
    hidden_size = 32

    params = init_params(k_param, input_size, hidden_size)
    x = jax.random.normal(k_x, (batch, input_size), jnp.float32)

    # single-tile path (grid == 1, batch smaller than one lane tile)
    a, b = actor_forward(x, params)
    jax.block_until_ready((a, b))
    a_ref, b_ref = actor_forward_ref(x, params)
    assert a.shape == (batch, 6) and b.shape == (batch, 6)
    assert jnp.allclose(a, a_ref, atol=5e-3, rtol=5e-3)
    assert jnp.allclose(b, b_ref, atol=5e-3, rtol=5e-3)

    # multi-tile path with ragged batch (grid > 1, partial last block handled by
    # Pallas boundary masking; no wrapper-side pad)
    x2 = jax.random.normal(jax.random.PRNGKey(1), (300, input_size), jnp.float32)
    a2, b2 = actor_forward(x2, params, tile_cap=256)
    jax.block_until_ready((a2, b2))
    a2_ref, b2_ref = actor_forward_ref(x2, params)
    assert a2.shape == (300, 6) and b2.shape == (300, 6)
    assert bool(jnp.all(jnp.isfinite(a2))) and bool(jnp.all(jnp.isfinite(b2)))
    assert jnp.allclose(a2, a2_ref, atol=5e-3, rtol=5e-3)
    assert jnp.allclose(b2, b2_ref, atol=5e-3, rtol=5e-3)

    print("KERNEL_OK")
</pallas_src>

<mosaic_0001>
module attributes {stable_mosaic.version = 11 : i64} {
  func.func @actor_forward_kernel(%arg0: i32, %arg1: memref<16x128xf32, #tpu.memory_space<vmem>>, %arg2: memref<32x16xbf16, #tpu.memory_space<vmem>>, %arg3: memref<32x1xf32, #tpu.memory_space<vmem>>, %arg4: memref<32x32xbf16, #tpu.memory_space<vmem>>, %arg5: memref<32x1xf32, #tpu.memory_space<vmem>>, %arg6: memref<32x32xbf16, #tpu.memory_space<vmem>>, %arg7: memref<32x1xf32, #tpu.memory_space<vmem>>, %arg8: memref<6x32xbf16, #tpu.memory_space<vmem>>, %arg9: memref<6x1xf32, #tpu.memory_space<vmem>>, %arg10: memref<6x32xbf16, #tpu.memory_space<vmem>>, %arg11: memref<6x1xf32, #tpu.memory_space<vmem>>, %arg12: memref<6x128xf32, #tpu.memory_space<vmem>>, %arg13: memref<6x128xf32, #tpu.memory_space<vmem>>) attributes {dimension_semantics = [#tpu.dimension_semantics<parallel>], iteration_bounds = array<i64: 1>, scalar_prefetch = 0 : i64, scratch_operands = 0 : i64, tpu.core_type = #tpu.core_type<tc>, window_params = [{transform_indices = @transform_0, window_bounds = array<i64: 16, 128>}, {pipeline_mode = #tpu.pipeline_mode<synchronous>, transform_indices = @transform_1, window_bounds = array<i64: 32, 16>}, {pipeline_mode = #tpu.pipeline_mode<synchronous>, transform_indices = @transform_2, window_bounds = array<i64: 32, 1>}, {pipeline_mode = #tpu.pipeline_mode<synchronous>, transform_indices = @transform_3, window_bounds = array<i64: 32, 32>}, {pipeline_mode = #tpu.pipeline_mode<synchronous>, transform_indices = @transform_4, window_bounds = array<i64: 32, 1>}, {pipeline_mode = #tpu.pipeline_mode<synchronous>, transform_indices = @transform_5, window_bounds = array<i64: 32, 32>}, {pipeline_mode = #tpu.pipeline_mode<synchronous>, transform_indices = @transform_6, window_bounds = array<i64: 32, 1>}, {pipeline_mode = #tpu.pipeline_mode<synchronous>, transform_indices = @transform_7, window_bounds = array<i64: 6, 32>}, {pipeline_mode = #tpu.pipeline_mode<synchronous>, transform_indices = @transform_8, window_bounds = array<i64: 6, 1>}, {pipeline_mode = #tpu.pipeline_mode<synchronous>, transform_indices = @transform_9, window_bounds = array<i64: 6, 32>}, {pipeline_mode = #tpu.pipeline_mode<synchronous>, transform_indices = @transform_10, window_bounds = array<i64: 6, 1>}, {transform_indices = @transform_11, window_bounds = array<i64: 6, 128>}, {transform_indices = @transform_12, window_bounds = array<i64: 6, 128>}]} {
    %c0 = arith.constant 0 : index
    %c0_0 = arith.constant 0 : index
    %0 = vector.load %arg1[%c0, %c0_0] : memref<16x128xf32, #tpu.memory_space<vmem>>, vector<16x128xf32>
    %1 = arith.truncf %0 : vector<16x128xf32> to vector<16x128xbf16>
    %c0_1 = arith.constant 0 : index
    %c0_2 = arith.constant 0 : index
    %2 = vector.load %arg2[%c0_1, %c0_2] : memref<32x16xbf16, #tpu.memory_space<vmem>>, vector<32x16xbf16>
    %cst = arith.constant dense<0.000000e+00> : vector<32x128xf32>
    %3 = tpu.matmul %2, %1, %cst {dimension_numbers = #tpu.dot_dimension_numbers<[1], [0], [0], [1], [0, 0, 1, 1], [], []>} : vector<32x16xbf16>, vector<16x128xbf16>, vector<32x128xf32> -> vector<32x128xf32>
    %c0_3 = arith.constant 0 : index
    %c0_4 = arith.constant 0 : index
    %4 = vector.load %arg3[%c0_3, %c0_4] : memref<32x1xf32, #tpu.memory_space<vmem>>, vector<32x1xf32>
    %5 = vector.broadcast %4 : vector<32x1xf32> to vector<32x128xf32>
    %6 = arith.addf %3, %5 : vector<32x128xf32>
    %cst_5 = arith.constant 0.000000e+00 : f32
    %7 = vector.broadcast %cst_5 : f32 to vector<32x128xf32>
    %8 = arith.cmpf oge, %6, %7 : vector<32x128xf32>
    %cst_6 = arith.constant 0.00999999977 : f32
    %9 = vector.broadcast %cst_6 : f32 to vector<32x128xf32>
    %10 = arith.mulf %9, %6 : vector<32x128xf32>
    %11 = arith.select %8, %6, %10 : vector<32x128xi1>, vector<32x128xf32>
    %12 = arith.truncf %11 : vector<32x128xf32> to vector<32x128xbf16>
    %c0_7 = arith.constant 0 : index
    %c0_8 = arith.constant 0 : index
    %13 = vector.load %arg4[%c0_7, %c0_8] : memref<32x32xbf16, #tpu.memory_space<vmem>>, vector<32x32xbf16>
    %cst_9 = arith.constant dense<0.000000e+00> : vector<32x128xf32>
    %14 = tpu.matmul %13, %12, %cst_9 {dimension_numbers = #tpu.dot_dimension_numbers<[1], [0], [0], [1], [0, 0, 1, 1], [], []>} : vector<32x32xbf16>, vector<32x128xbf16>, vector<32x128xf32> -> vector<32x128xf32>
    %c0_10 = arith.constant 0 : index
    %c0_11 = arith.constant 0 : index
    %15 = vector.load %arg5[%c0_10, %c0_11] : memref<32x1xf32, #tpu.memory_space<vmem>>, vector<32x1xf32>
    %16 = vector.broadcast %15 : vector<32x1xf32> to vector<32x128xf32>
    %17 = arith.addf %14, %16 : vector<32x128xf32>
    %cst_12 = arith.constant 0.000000e+00 : f32
    %18 = vector.broadcast %cst_12 : f32 to vector<32x128xf32>
    %19 = arith.cmpf oge, %17, %18 : vector<32x128xf32>
    %cst_13 = arith.constant 0.00999999977 : f32
    %20 = vector.broadcast %cst_13 : f32 to vector<32x128xf32>
    %21 = arith.mulf %20, %17 : vector<32x128xf32>
    %22 = arith.select %19, %17, %21 : vector<32x128xi1>, vector<32x128xf32>
    %23 = arith.truncf %22 : vector<32x128xf32> to vector<32x128xbf16>
    %c0_14 = arith.constant 0 : index
    %c0_15 = arith.constant 0 : index
    %24 = vector.load %arg6[%c0_14, %c0_15] : memref<32x32xbf16, #tpu.memory_space<vmem>>, vector<32x32xbf16>
    %cst_16 = arith.constant dense<0.000000e+00> : vector<32x128xf32>
    %25 = tpu.matmul %24, %23, %cst_16 {dimension_numbers = #tpu.dot_dimension_numbers<[1], [0], [0], [1], [0, 0, 1, 1], [], []>} : vector<32x32xbf16>, vector<32x128xbf16>, vector<32x128xf32> -> vector<32x128xf32>
    %c0_17 = arith.constant 0 : index
    %c0_18 = arith.constant 0 : index
    %26 = vector.load %arg7[%c0_17, %c0_18] : memref<32x1xf32, #tpu.memory_space<vmem>>, vector<32x1xf32>
    %27 = vector.broadcast %26 : vector<32x1xf32> to vector<32x128xf32>
    %28 = arith.addf %25, %27 : vector<32x128xf32>
    %cst_19 = arith.constant 0.000000e+00 : f32
    %29 = vector.broadcast %cst_19 : f32 to vector<32x128xf32>
    %30 = arith.cmpf oge, %28, %29 : vector<32x128xf32>
    %cst_20 = arith.constant 0.00999999977 : f32
    %31 = vector.broadcast %cst_20 : f32 to vector<32x128xf32>
    %32 = arith.mulf %31, %28 : vector<32x128xf32>
    %33 = arith.select %30, %28, %32 : vector<32x128xi1>, vector<32x128xf32>
    %34 = arith.truncf %33 : vector<32x128xf32> to vector<32x128xbf16>
    %c0_21 = arith.constant 0 : index
    %c0_22 = arith.constant 0 : index
    %35 = vector.load %arg8[%c0_21, %c0_22] : memref<6x32xbf16, #tpu.memory_space<vmem>>, vector<6x32xbf16>
    %cst_23 = arith.constant dense<0.000000e+00> : vector<6x128xf32>
    %36 = tpu.matmul %35, %34, %cst_23 {dimension_numbers = #tpu.dot_dimension_numbers<[1], [0], [0], [1], [0, 0, 1, 1], [], []>} : vector<6x32xbf16>, vector<32x128xbf16>, vector<6x128xf32> -> vector<6x128xf32>
    %c0_24 = arith.constant 0 : index
    %c0_25 = arith.constant 0 : index
    %37 = vector.load %arg9[%c0_24, %c0_25] : memref<6x1xf32, #tpu.memory_space<vmem>>, vector<6x1xf32>
    %38 = vector.broadcast %37 : vector<6x1xf32> to vector<6x128xf32>
    %39 = arith.addf %36, %38 : vector<6x128xf32>
    %cst_26 = arith.constant 0.000000e+00 : f32
    %40 = vector.broadcast %cst_26 : f32 to vector<6x128xf32>
    %41 = arith.maximumf %39, %40 : vector<6x128xf32>
    %42 = math.absf %39 : vector<6x128xf32>
    %cst_27 = arith.constant 0.000000e+00 : f32
    %43 = vector.broadcast %cst_27 : f32 to vector<6x128xf32>
    %44 = arith.subf %43, %42 : vector<6x128xf32>
    %45 = math.exp %44 : vector<6x128xf32>
    %46 = math.log1p %45 : vector<6x128xf32>
    %47 = arith.addf %41, %46 : vector<6x128xf32>
    %cst_28 = arith.constant 1.000000e+00 : f32
    %48 = vector.broadcast %cst_28 : f32 to vector<6x128xf32>
    %49 = arith.addf %47, %48 : vector<6x128xf32>
    %c0_29 = arith.constant 0 : index
    %c0_30 = arith.constant 0 : index
    %50 = vector.load %arg12[%c0_29, %c0_30] : memref<6x128xf32, #tpu.memory_space<vmem>>, vector<6x128xf32>
    tpu.vector_store %arg12[%c0_29, %c0_30], %49 {strides = array<i32>} : memref<6x128xf32, #tpu.memory_space<vmem>>, vector<6x128xf32>,
    %c0_31 = arith.constant 0 : index
    %c0_32 = arith.constant 0 : index
    %51 = vector.load %arg10[%c0_31, %c0_32] : memref<6x32xbf16, #tpu.memory_space<vmem>>, vector<6x32xbf16>
    %cst_33 = arith.constant dense<0.000000e+00> : vector<6x128xf32>
    %52 = tpu.matmul %51, %34, %cst_33 {dimension_numbers = #tpu.dot_dimension_numbers<[1], [0], [0], [1], [0, 0, 1, 1], [], []>} : vector<6x32xbf16>, vector<32x128xbf16>, vector<6x128xf32> -> vector<6x128xf32>
    %c0_34 = arith.constant 0 : index
    %c0_35 = arith.constant 0 : index
    %53 = vector.load %arg11[%c0_34, %c0_35] : memref<6x1xf32, #tpu.memory_space<vmem>>, vector<6x1xf32>
    %54 = vector.broadcast %53 : vector<6x1xf32> to vector<6x128xf32>
    %55 = arith.addf %52, %54 : vector<6x128xf32>
    %cst_36 = arith.constant 0.000000e+00 : f32
    %56 = vector.broadcast %cst_36 : f32 to vector<6x128xf32>
    %57 = arith.maximumf %55, %56 : vector<6x128xf32>
    %58 = math.absf %55 : vector<6x128xf32>
    %cst_37 = arith.constant 0.000000e+00 : f32
    %59 = vector.broadcast %cst_37 : f32 to vector<6x128xf32>
    %60 = arith.subf %59, %58 : vector<6x128xf32>
    %61 = math.exp %60 : vector<6x128xf32>
    %62 = math.log1p %61 : vector<6x128xf32>
    %63 = arith.addf %57, %62 : vector<6x128xf32>
    %cst_38 = arith.constant 1.000000e+00 : f32
    %64 = vector.broadcast %cst_38 : f32 to vector<6x128xf32>
    %65 = arith.addf %63, %64 : vector<6x128xf32>
    %c0_39 = arith.constant 0 : index
    %c0_40 = arith.constant 0 : index
    %66 = vector.load %arg13[%c0_39, %c0_40] : memref<6x128xf32, #tpu.memory_space<vmem>>, vector<6x128xf32>
    tpu.vector_store %arg13[%c0_39, %c0_40], %65 {strides = array<i32>} : memref<6x128xf32, #tpu.memory_space<vmem>>, vector<6x128xf32>,
    return
  }
  func.func @transform_0(%arg0: i32) -> (i32, i32) {
    %c0_i32 = arith.constant 0 : i32
    %c0_i32_0 = arith.constant 0 : i32
    return %c0_i32, %arg0 : i32, i32
  }
  func.func @transform_1(%arg0: i32) -> (i32, i32) {
    %c0_i32 = arith.constant 0 : i32
    %c0_i32_0 = arith.constant 0 : i32
    %c0_i32_1 = arith.constant 0 : i32
    return %c0_i32, %c0_i32_0 : i32, i32
  }
  func.func @transform_2(%arg0: i32) -> (i32, i32) {
    %c0_i32 = arith.constant 0 : i32
    %c0_i32_0 = arith.constant 0 : i32
    %c0_i32_1 = arith.constant 0 : i32
    return %c0_i32, %c0_i32_0 : i32, i32
  }
  func.func @transform_3(%arg0: i32) -> (i32, i32) {
    %c0_i32 = arith.constant 0 : i32
    %c0_i32_0 = arith.constant 0 : i32
    %c0_i32_1 = arith.constant 0 : i32
    return %c0_i32, %c0_i32_0 : i32, i32
  }
  func.func @transform_4(%arg0: i32) -> (i32, i32) {
    %c0_i32 = arith.constant 0 : i32
    %c0_i32_0 = arith.constant 0 : i32
    %c0_i32_1 = arith.constant 0 : i32
    return %c0_i32, %c0_i32_0 : i32, i32
  }
  func.func @transform_5(%arg0: i32) -> (i32, i32) {
    %c0_i32 = arith.constant 0 : i32
    %c0_i32_0 = arith.constant 0 : i32
    %c0_i32_1 = arith.constant 0 : i32
    return %c0_i32, %c0_i32_0 : i32, i32
  }
  func.func @transform_6(%arg0: i32) -> (i32, i32) {
    %c0_i32 = arith.constant 0 : i32
    %c0_i32_0 = arith.constant 0 : i32
    %c0_i32_1 = arith.constant 0 : i32
    return %c0_i32, %c0_i32_0 : i32, i32
  }
  func.func @transform_7(%arg0: i32) -> (i32, i32) {
    %c0_i32 = arith.constant 0 : i32
    %c0_i32_0 = arith.constant 0 : i32
    %c0_i32_1 = arith.constant 0 : i32
    return %c0_i32, %c0_i32_0 : i32, i32
  }
  func.func @transform_8(%arg0: i32) -> (i32, i32) {
    %c0_i32 = arith.constant 0 : i32
    %c0_i32_0 = arith.constant 0 : i32
    %c0_i32_1 = arith.constant 0 : i32
    return %c0_i32, %c0_i32_0 : i32, i32
  }
  func.func @transform_9(%arg0: i32) -> (i32, i32) {
    %c0_i32 = arith.constant 0 : i32
    %c0_i32_0 = arith.constant 0 : i32
    %c0_i32_1 = arith.constant 0 : i32
    return %c0_i32, %c0_i32_0 : i32, i32
  }
  func.func @transform_10(%arg0: i32) -> (i32, i32) {
    %c0_i32 = arith.constant 0 : i32
    %c0_i32_0 = arith.constant 0 : i32
    %c0_i32_1 = arith.constant 0 : i32
    return %c0_i32, %c0_i32_0 : i32, i32
  }
  func.func @transform_11(%arg0: i32) -> (i32, i32) {
    %c0_i32 = arith.constant 0 : i32
    %c0_i32_0 = arith.constant 0 : i32
    return %c0_i32, %arg0 : i32, i32
  }
  func.func @transform_12(%arg0: i32) -> (i32, i32) {
    %c0_i32 = arith.constant 0 : i32
    %c0_i32_0 = arith.constant 0 : i32
    return %c0_i32, %arg0 : i32, i32
  }
}

</mosaic_0001>

<llo_original>
// kernel: tpu_custom_call.1
$region0: #{tpu_custom_call.1}
  #allocation0 [shape = 'u32[]', space=smem, size = 0x4, offset = 0x4, fixed_abs, tag = 'smem constant byte address 0x4 - core index']
  #allocation1 [shape = 'u32[72,128]{1,0:T(1,128)}', space=vmem, size = 0x9000, scoped, tag = 'internal scratch']
  %s0 = inlined_call_operand.vmem [shape: f32[16,8], index: 0, kind: input, shape index: {}]
  %s1 = inlined_call_operand.vmem [shape: bf16[32,16], index: 1, kind: input, shape index: {}]
  %s2 = inlined_call_operand.vmem [shape: f32[32,1], index: 2, kind: input, shape index: {}]
  %s3 = inlined_call_operand.vmem [shape: bf16[32,32], index: 3, kind: input, shape index: {}]
  %s4 = inlined_call_operand.vmem [shape: f32[32,1], index: 4, kind: input, shape index: {}]
  %s5 = inlined_call_operand.vmem [shape: bf16[32,32], index: 5, kind: input, shape index: {}]
  %s6 = inlined_call_operand.vmem [shape: f32[32,1], index: 6, kind: input, shape index: {}]
  %s7 = inlined_call_operand.vmem [shape: bf16[6,32], index: 7, kind: input, shape index: {}]
  %s8 = inlined_call_operand.vmem [shape: f32[6,1], index: 8, kind: input, shape index: {}]
  %s9 = inlined_call_operand.vmem [shape: bf16[6,32], index: 9, kind: input, shape index: {}]
  %s10 = inlined_call_operand.vmem [shape: f32[6,1], index: 10, kind: input, shape index: {}]
  %s11 = inlined_call_operand.hbm [shape: f32[6,8], index: 11, kind: output, shape index: {0}]
  %s12 = inlined_call_operand.hbm [shape: f32[6,8], index: 12, kind: output, shape index: {1}]
  %13 = xla_tuple %s11, %s12
  %s14 = sld [smem:[#allocation0]]
  $region62: #{tpu_custom_call.1} parent=0
    _
  %s16 = ssub.s32 1, %s14
  %s17 = scalar_select 0, %s16, %s14
  $region1: #{tpu_custom_call.1} parent=0
    #allocation2 [shape = 'u8[4096]{0}', space=vmem, size = 0x1000, scoped, tag = 'output window, operand 0, single buffered']
    #allocation3 [shape = 's32[1]{0}', space=sflag, size = 0x4, scoped, tag = 'scoped memory for tpu_custom_call.1']
    #allocation4 [shape = 'u8[4096]{0}', space=vmem, size = 0x1000, scoped, tag = 'output window, operand 1, single buffered']
    #allocation5 [shape = 's32[1]{0}', space=sflag, size = 0x4, scoped, tag = 'scoped memory for tpu_custom_call.1']
    %18 = vsyncpa [#allocation3], 0
    %19 = vsyncpa [#allocation5], 0
    // Predicated region
    $region2: #{tpu_custom_call.1} parent=1 // pred_check
      _
    $region3: #{tpu_custom_call.1} parent=1 // pred_check_branch
      %21 = sbr.rel (0) target = $region5
    $region4: #{tpu_custom_call.1} parent=1 // pred_region
      _
    $region5: #{tpu_custom_call.1} parent=1 // pred_fallthru
      _
    // Predicated region
    $region6: #{tpu_custom_call.1} parent=1 // pred_check
      _
    $region7: #{tpu_custom_call.1} parent=1 // pred_check_branch
      %23 = sbr.rel (0) target = $region9
    $region8: #{tpu_custom_call.1} parent=1 // pred_region
      _
    $region9: #{tpu_custom_call.1} parent=1 // pred_fallthru
      _
    // Predicated region
    $region10: #{tpu_custom_call.1} parent=1 // pred_check
      _
    $region11: #{tpu_custom_call.1} parent=1 // pred_check_branch
      %25 = sbr.rel (0) target = $region13
    $region12: #{tpu_custom_call.1} parent=1 // pred_region
      _
    $region13: #{tpu_custom_call.1} parent=1 // pred_fallthru
      _
    // Predicated region
    $region14: #{tpu_custom_call.1} parent=1 // pred_check
      _
    $region15: #{tpu_custom_call.1} parent=1 // pred_check_branch
      %27 = sbr.rel (0) target = $region17
    $region16: #{tpu_custom_call.1} parent=1 // pred_region
      _
    $region17: #{tpu_custom_call.1} parent=1 // pred_fallthru
      _
    // Predicated region
    $region18: #{tpu_custom_call.1} parent=1 // pred_check
      _
    $region19: #{tpu_custom_call.1} parent=1 // pred_check_branch
      %29 = sbr.rel (0) target = $region21
    $region20: #{tpu_custom_call.1} parent=1 // pred_region
      _
    $region21: #{tpu_custom_call.1} parent=1 // pred_fallthru
      _
    // Predicated region
    $region22: #{tpu_custom_call.1} parent=1 // pred_check
      _
    $region23: #{tpu_custom_call.1} parent=1 // pred_check_branch
      %31 = sbr.rel (0) target = $region25
    $region24: #{tpu_custom_call.1} parent=1 // pred_region
      _
    $region25: #{tpu_custom_call.1} parent=1 // pred_fallthru
      _
    // Predicated region
    $region26: #{tpu_custom_call.1} parent=1 // pred_check
      _
    $region27: #{tpu_custom_call.1} parent=1 // pred_check_branch
      %33 = sbr.rel (0) target = $region29
    $region28: #{tpu_custom_call.1} parent=1 // pred_region
      _
    $region29: #{tpu_custom_call.1} parent=1 // pred_fallthru
      _
    // Predicated region
    $region30: #{tpu_custom_call.1} parent=1 // pred_check
      _
    $region31: #{tpu_custom_call.1} parent=1 // pred_check_branch
      %35 = sbr.rel (0) target = $region33
    $region32: #{tpu_custom_call.1} parent=1 // pred_region
      _
    $region33: #{tpu_custom_call.1} parent=1 // pred_fallthru
      _
    // Predicated region
    $region34: #{tpu_custom_call.1} parent=1 // pred_check
      _
    $region35: #{tpu_custom_call.1} parent=1 // pred_check_branch
      %37 = sbr.rel (0) target = $region37
    $region36: #{tpu_custom_call.1} parent=1 // pred_region
      _
    $region37: #{tpu_custom_call.1} parent=1 // pred_fallthru
      _
    // Predicated region
    $region38: #{tpu_custom_call.1} parent=1 // pred_check
      _
    $region39: #{tpu_custom_call.1} parent=1 // pred_check_branch
      %39 = sbr.rel (0) target = $region41
    $region40: #{tpu_custom_call.1} parent=1 // pred_region
      _
    $region41: #{tpu_custom_call.1} parent=1 // pred_fallthru
      _
    // Predicated region
    $region42: #{tpu_custom_call.1} parent=1 // pred_check
      _
    $region43: #{tpu_custom_call.1} parent=1 // pred_check_branch
      %41 = sbr.rel (0) target = $region45
    $region44: #{tpu_custom_call.1} parent=1 // pred_region
      _
    $region45: #{tpu_custom_call.1} parent=1 // pred_fallthru
      _
    %v43 = vld [vmem:[%s0] sm:$0xff]
    %v44 = vld [vmem:[%s0 + $0x8] sm:$0xff]
    %v45 = vpack.c.bf16 %v44, %v43
    %v46 = vld [vmem:[%s1] sm:$0xf]
    %v47 = vld [vmem:[%s1 + $0x4] sm:$0xf]
    %v48 = vld [vmem:[%s1 + $0x8] sm:$0xf]
    %v49 = vld [vmem:[%s1 + $0xc] sm:$0xf]
    %v50 = vld [vmem:[%s2] sm:$0xff]
    %v51 = vld [vmem:[%s2 + $0x8] sm:$0xff]
    %v52 = vld [vmem:[%s2 + $0x10] sm:$0xff]
    %v53 = vld [vmem:[%s2 + $0x18] sm:$0xff]
    %55 = vset.pattern.permute.xlu0 0
    %56 = vperm.xlu0 %55, %v50
    %v57 = vpop.permute.xlu0 %56
    %60 = vset.pattern.permute.xlu0 0
    %61 = vperm.xlu0 %60, %v51
    %v62 = vpop.permute.xlu0 %61
    %65 = vset.pattern.permute.xlu0 0
    %66 = vperm.xlu0 %65, %v52
    %v67 = vpop.permute.xlu0 %66
    %70 = vset.pattern.permute.xlu0 0
    %71 = vperm.xlu0 %70, %v53
    %v72 = vpop.permute.xlu0 %71
    %v78 = vunpack.c.l.b16 %v46
    %v79 = vunpack.c.l.b16 %v47
    %v80 = vunpack.c.l.b16 %v48
    %v81 = vunpack.c.l.b16 %v49
    %v82 = vpack.c.b16 %v79, %v78
    %v83 = vpack.c.b16 %v81, %v80
    %vm84 = vcmask 130048
    %v86 = vsel %vm84, %v82, 0
    %v89 = vsel %vm84, %v83, 0
    %91 = vmatpush.bf16.msra.mxu0 0
    %92 = vmatpush.bf16.msra.mxu0 0
    %93 = vmatpush.bf16.msra.mxu0 0
    %94 = vmatpush.bf16.msra.mxu0 0
    %95 = vmatpush.bf16.msra.mxu0 0
    %96 = vmatpush.bf16.msra.mxu0 0
    %97 = vmatpush.bf16.msra.mxu0 0
    %98 = vmatpush.bf16.msra.mxu0 %v45
    %99 = vmatmul.bf16.gmra.mxu0 %v86
    %v100 = vpop.f32.mrf.mxu0
    %v101 = vadd.f32 %v57, %v100
    %v102 = vpop.f32.mrf.mxu0
    %v103 = vadd.f32 %v62, %v102
    %104 = vmatmul.bf16.gmra.mxu0 %v89
    %v105 = vpop.f32.mrf.mxu0
    %v106 = vadd.f32 %v67, %v105
    %v107 = vpop.f32.mrf.mxu0
    %v108 = vadd.f32 %v72, %v107
    %109 = vdwg.mxu0
    %vm110 = vcmp.ge.f32.partialorder %v101, 0.0
    %vm111 = vcmp.ge.f32.partialorder %v103, 0.0
    %vm112 = vcmp.ge.f32.partialorder %v106, 0.0
    %vm113 = vcmp.ge.f32.partialorder %v108, 0.0
    %v114 = vmul.f32 %v101, 0.01
    %v115 = vmul.f32 %v103, 0.01
    %v116 = vmul.f32 %v106, 0.01
    %v117 = vmul.f32 %v108, 0.01
    %v118 = vsel %vm110, %v101, %v114
    %v119 = vsel %vm111, %v103, %v115
    %v120 = vsel %vm112, %v106, %v116
    %v121 = vsel %vm113, %v108, %v117
    %v122 = vpack.c.bf16 %v119, %v118
    %v123 = vpack.c.bf16 %v121, %v120
    %v124 = vld [vmem:[%s3] sm:$0xf]
    %v125 = vld [vmem:[%s3 + $0x4] sm:$0xf]
    %v126 = vld [vmem:[%s3 + $0x8] sm:$0xf]
    %v127 = vld [vmem:[%s3 + $0xc] sm:$0xf]
    %v128 = vld [vmem:[%s4] sm:$0xff]
    %v129 = vld [vmem:[%s4 + $0x8] sm:$0xff]
    %v130 = vld [vmem:[%s4 + $0x10] sm:$0xff]
    %v131 = vld [vmem:[%s4 + $0x18] sm:$0xff]
    %133 = vset.pattern.permute.xlu0 0
    %134 = vperm.xlu0 %133, %v128
    %v135 = vpop.permute.xlu0 %134
    %138 = vset.pattern.permute.xlu0 0
    %139 = vperm.xlu0 %138, %v129
    %v140 = vpop.permute.xlu0 %139
    %143 = vset.pattern.permute.xlu0 0
    %144 = vperm.xlu0 %143, %v130
    %v145 = vpop.permute.xlu0 %144
    %148 = vset.pattern.permute.xlu0 0
    %149 = vperm.xlu0 %148, %v131
    %v150 = vpop.permute.xlu0 %149
    %v156 = vunpack.c.l.b16 %v124
    %v157 = vunpack.c.l.b16 %v125
    %v158 = vunpack.c.l.b16 %v126
    %v159 = vunpack.c.l.b16 %v127
    %v160 = vpack.c.b16 %v157, %v156
    %v161 = vpack.c.b16 %v159, %v158
    %vm162 = vcmask 261120
    %v164 = vsel %vm162, %v160, 0
    %v167 = vsel %vm162, %v161, 0
    %169 = vmatpush.bf16.msra.mxu0 0
    %170 = vmatpush.bf16.msra.mxu0 0
    %171 = vmatpush.bf16.msra.mxu0 0
    %172 = vmatpush.bf16.msra.mxu0 0
    %173 = vmatpush.bf16.msra.mxu0 0
    %174 = vmatpush.bf16.msra.mxu0 0
    %175 = vmatpush.bf16.msra.mxu0 %v123
    %176 = vmatpush.bf16.msra.mxu0 %v122
    %177 = vmatmul.bf16.gmra.mxu0 %v164
    %v178 = vpop.f32.mrf.mxu0
    %v179 = vadd.f32 %v135, %v178
    %v180 = vpop.f32.mrf.mxu0
    %v181 = vadd.f32 %v140, %v180
    %182 = vmatmul.bf16.gmra.mxu0 %v167
    %v183 = vpop.f32.mrf.mxu0
    %v184 = vadd.f32 %v145, %v183
    %v185 = vpop.f32.mrf.mxu0
    %v186 = vadd.f32 %v150, %v185
    %187 = vdwg.mxu0
    %vm188 = vcmp.ge.f32.partialorder %v179, 0.0
    %vm189 = vcmp.ge.f32.partialorder %v181, 0.0
    %vm190 = vcmp.ge.f32.partialorder %v184, 0.0
    %vm191 = vcmp.ge.f32.partialorder %v186, 0.0
    %v192 = vmul.f32 %v179, 0.01
    %v193 = vmul.f32 %v181, 0.01
    %v194 = vmul.f32 %v184, 0.01
    %v195 = vmul.f32 %v186, 0.01
    %v196 = vsel %vm188, %v179, %v192
    %v197 = vsel %vm189, %v181, %v193
    %v198 = vsel %vm190, %v184, %v194
    %v199 = vsel %vm191, %v186, %v195
    %v200 = vpack.c.bf16 %v197, %v196
    %v201 = vpack.c.bf16 %v199, %v198
    %v202 = vld [vmem:[%s5] sm:$0xf]
    %v203 = vld [vmem:[%s5 + $0x4] sm:$0xf]
    %v204 = vld [vmem:[%s5 + $0x8] sm:$0xf]
    %v205 = vld [vmem:[%s5 + $0xc] sm:$0xf]
    %v206 = vld [vmem:[%s6] sm:$0xff]
    %v207 = vld [vmem:[%s6 + $0x8] sm:$0xff]
    %v208 = vld [vmem:[%s6 + $0x10] sm:$0xff]
    %v209 = vld [vmem:[%s6 + $0x18] sm:$0xff]
    %211 = vset.pattern.permute.xlu0 0
    %212 = vperm.xlu0 %211, %v206
    %v213 = vpop.permute.xlu0 %212
    %216 = vset.pattern.permute.xlu0 0
    %217 = vperm.xlu0 %216, %v207
    %v218 = vpop.permute.xlu0 %217
    %221 = vset.pattern.permute.xlu0 0
    %222 = vperm.xlu0 %221, %v208
    %v223 = vpop.permute.xlu0 %222
    %226 = vset.pattern.permute.xlu0 0
    %227 = vperm.xlu0 %226, %v209
    %v228 = vpop.permute.xlu0 %227
    %v234 = vunpack.c.l.b16 %v202
    %v235 = vunpack.c.l.b16 %v203
    %v236 = vunpack.c.l.b16 %v204
    %v237 = vunpack.c.l.b16 %v205
    %v238 = vpack.c.b16 %v235, %v234
    %v239 = vpack.c.b16 %v237, %v236
    %v241 = vsel %vm162, %v238, 0
    %v244 = vsel %vm162, %v239, 0
    %246 = vmatpush.bf16.msra.mxu0 0
    %247 = vmatpush.bf16.msra.mxu0 0
    %248 = vmatpush.bf16.msra.mxu0 0
    %249 = vmatpush.bf16.msra.mxu0 0
    %250 = vmatpush.bf16.msra.mxu0 0
    %251 = vmatpush.bf16.msra.mxu0 0
    %252 = vmatpush.bf16.msra.mxu0 %v201
    %253 = vmatpush.bf16.msra.mxu0 %v200
    %254 = vmatmul.bf16.gmra.mxu0 %v241
    %v255 = vpop.f32.mrf.mxu0
    %v256 = vadd.f32 %v213, %v255
    %v257 = vpop.f32.mrf.mxu0
    %v258 = vadd.f32 %v218, %v257
    %259 = vmatmul.bf16.gmra.mxu0 %v244
    %v260 = vpop.f32.mrf.mxu0
    %v261 = vadd.f32 %v223, %v260
    %v262 = vpop.f32.mrf.mxu0
    %v263 = vadd.f32 %v228, %v262
    %264 = vdwg.mxu0
    %vm265 = vcmp.ge.f32.partialorder %v256, 0.0
    %vm266 = vcmp.ge.f32.partialorder %v258, 0.0
    %vm267 = vcmp.ge.f32.partialorder %v261, 0.0
    %vm268 = vcmp.ge.f32.partialorder %v263, 0.0
    %v269 = vmul.f32 %v256, 0.01
    %v270 = vmul.f32 %v258, 0.01
    %v271 = vmul.f32 %v261, 0.01
    %v272 = vmul.f32 %v263, 0.01
    %v273 = vsel %vm265, %v256, %v269
    %v274 = vsel %vm266, %v258, %v270
    %v275 = vsel %vm267, %v261, %v271
    %v276 = vsel %vm268, %v263, %v272
    %v277 = vpack.c.bf16 %v274, %v273
    %v278 = vpack.c.bf16 %v276, %v275
    %v279 = vld [vmem:[%s7] sm:$0x7]
    %v280 = vld [vmem:[%s8] sm:$0x3f]
    %282 = vset.pattern.permute.xlu0 0
    %283 = vperm.xlu0 %282, %v280
    %v284 = vpop.permute.xlu0 %283
    %v287 = vsel %vm162, %v279, 0
    %289 = vmatpush.bf16.msra.mxu0 0
    %290 = vmatpush.bf16.msra.mxu0 0
    %291 = vmatpush.bf16.msra.mxu0 0
    %292 = vmatpush.bf16.msra.mxu0 0
    %293 = vmatpush.bf16.msra.mxu0 0
    %294 = vmatpush.bf16.msra.mxu0 0
    %295 = vmatpush.bf16.msra.mxu0 %v278
    %296 = vmatpush.bf16.msra.mxu0 %v277
    %297 = vmatmul.bf16.gmra.mxu0 %v287
    %v298 = vpop.f32.mrf.mxu0
    %v299 = vadd.f32 %v284, %v298
    %v300 = vpop.f32.mrf.mxu0
    %301 = vdwg.mxu0
    %v302 = vmax.f32 %v299, 0.0
    %v303 = vand.u32 2147483647, %v299
    %v304 = vsub.f32 0.0, %v303
    %v305 = vmul.f32 %v304, 1.442695
    %v306 = vpow.pop %v305
    %v307 = vadd.f32 %v306, 1.0
    %v308 = vlog2.pop %v307
    %v309 = vmul.f32 %v308, 0.6931472
    %v310 = vmul.f32 -0.5, %v306
    %v311 = vadd.f32 %v310, 1.0
    %v312 = vmul.f32 %v311, %v306
    %v313 = vand.u32 2147483647, %v306
    %vm314 = vcmp.lt.f32.partialorder %v313, 0.0004427343
    %v315 = vsel %vm314, %v312, %v309
    %v316 = vadd.f32 %v302, %v315
    %v317 = vadd.f32 %v316, 1.0
    %318 = vst [vmem:[#allocation2] sm:$0x3f] %v317
    %v319 = vld [vmem:[%s9] sm:$0x7]
    %v320 = vld [vmem:[%s10] sm:$0x3f]
    %322 = vset.pattern.permute.xlu0 0
    %323 = vperm.xlu0 %322, %v320
    %v324 = vpop.permute.xlu0 %323
    %v327 = vsel %vm162, %v319, 0
    %329 = vmatpush.bf16.msra.mxu0 0
    %330 = vmatpush.bf16.msra.mxu0 0
    %331 = vmatpush.bf16.msra.mxu0 0
    %332 = vmatpush.bf16.msra.mxu0 0
    %333 = vmatpush.bf16.msra.mxu0 0
    %334 = vmatpush.bf16.msra.mxu0 0
    %335 = vmatpush.bf16.msra.mxu0 %v278
    %336 = vmatpush.bf16.msra.mxu0 %v277
    %337 = vmatmul.bf16.gmra.mxu0 %v327
    %v338 = vpop.f32.mrf.mxu0
    %v339 = vadd.f32 %v324, %v338
    %v340 = vpop.f32.mrf.mxu0
    %341 = vdwg.mxu0
    %v342 = vmax.f32 %v339, 0.0
    %v343 = vand.u32 2147483647, %v339
    %v344 = vsub.f32 0.0, %v343
    %v345 = vmul.f32 %v344, 1.442695
    %v346 = vpow.pop %v345
    %v347 = vadd.f32 %v346, 1.0
    %v348 = vlog2.pop %v347
    %v349 = vmul.f32 %v348, 0.6931472
    %v350 = vmul.f32 -0.5, %v346
    %v351 = vadd.f32 %v350, 1.0
    %v352 = vmul.f32 %v351, %v346
    %v353 = vand.u32 2147483647, %v346
    %vm354 = vcmp.lt.f32.partialorder %v353, 0.0004427343
    %v355 = vsel %vm354, %v352, %v349
    %v356 = vadd.f32 %v342, %v355
    %v357 = vadd.f32 %v356, 1.0
    %358 = vst [vmem:[#allocation4] sm:$0x3f] %v357
    // Predicated region
    $region46: #{tpu_custom_call.1} parent=1 // pred_check
      _
    $region47: #{tpu_custom_call.1} parent=1 // pred_check_branch
      %360 = sbr.rel (0) target = $region49
    $region48: #{tpu_custom_call.1} parent=1 // pred_region
      %362 = vsyncadd [#allocation3], 0
      %s364 = sshll.u32 [#allocation2], 4
      %s365 = int_to_ptr.vmem [resolvable:$true] %s364
      %s366 = sshll.u32 %s11, 4
      %s367 = int_to_ptr.hbm [resolvable:$true] %s366
      %369 = dma.vmem_to_hbm [thread:$0]  %s365, 128, %s367, [#allocation3]
    $region49: #{tpu_custom_call.1} parent=1 // pred_fallthru
      _
    // Predicated region
    $region50: #{tpu_custom_call.1} parent=1 // pred_check
      _
    $region51: #{tpu_custom_call.1} parent=1 // pred_check_branch
      %371 = sbr.rel (0) target = $region53
    $region52: #{tpu_custom_call.1} parent=1 // pred_region
      %373 = vsyncadd [#allocation5], 0
      %s375 = sshll.u32 [#allocation4], 4
      %s376 = int_to_ptr.vmem [resolvable:$true] %s375
      %s377 = sshll.u32 %s12, 4
      %s378 = int_to_ptr.hbm [resolvable:$true] %s377
      %380 = dma.vmem_to_hbm [thread:$0]  %s376, 128, %s378, [#allocation5]
    $region53: #{tpu_custom_call.1} parent=1 // pred_fallthru
      _
    // Predicated region
    $region54: #{tpu_custom_call.1} parent=1 // pred_check
      _
    $region55: #{tpu_custom_call.1} parent=1 // pred_check_branch
      %382 = sbr.rel (0) target = $region57
    $region56: #{tpu_custom_call.1} parent=1 // pred_region
      %384 = dma.done [#allocation3], 128
    $region57: #{tpu_custom_call.1} parent=1 // pred_fallthru
      _
    // Predicated region
    $region58: #{tpu_custom_call.1} parent=1 // pred_check
      _
    $region59: #{tpu_custom_call.1} parent=1 // pred_check_branch
      %386 = sbr.rel (0) target = $region61
    $region60: #{tpu_custom_call.1} parent=1 // pred_region
      %388 = dma.done [#allocation5], 128
    $region61: #{tpu_custom_call.1} parent=1 // pred_fallthru
      _
    %389 = vsyncpa [#allocation3], 1
    %390 = vsyncpa [#allocation5], 1

</llo_original>
